<compile_context>
chip_gen: v7x
topology: tpu7x:2x2x1
jax: 0.10.0
libtpu: 0.0.40
codegen_flags: <defaults>
</compile_context>

<pallas_src>
import math

import jax
import jax.numpy as jnp
from jax.experimental import pallas as pl
from jax.experimental.pallas import tpu as pltpu


def _pick_tile(n, candidates):
    for c in candidates:
        if c <= n and n % c == 0:
            return c
    return n


def _round_up(x, m):
    return ((x + m - 1) // m) * m


# ----------------------------------------------------------------------------
# Kernel 1: fused NN-layer stack (DistNNLayer x nlayers, ReLU between layers).
#   grid = (M // tm,), weights resident in VMEM, x/out tiled over M.
# ----------------------------------------------------------------------------
def _fused_mlp_kernel(x_ref, *refs):
    o_ref = refs[-1]
    w_refs = refs[:-1]
    h = x_ref[...]
    for idx, w_ref in enumerate(w_refs):
        h = jnp.dot(h, w_ref[...], preferred_element_type=jnp.float32)
        if idx != len(w_refs) - 1:
            h = jnp.maximum(h, 0.0)
    o_ref[...] = h.astype(o_ref.dtype)


def fused_mlp(x, weights, tm=None):
    M, K = x.shape
    n_out = weights[-1].shape[1]
    if tm is None:
        tm = _pick_tile(M, (512, 256, 128, 64, 32, 16, 8))
    assert M % tm == 0

    in_specs = [pl.BlockSpec((tm, K), lambda i: (i, 0))]
    for w in weights:
        in_specs.append(pl.BlockSpec(w.shape, lambda i: (0, 0)))  # resident

    return pl.pallas_call(
        _fused_mlp_kernel,
        out_shape=jax.ShapeDtypeStruct((M, n_out), jnp.float32),
        grid=(M // tm,),
        in_specs=in_specs,
        out_specs=pl.BlockSpec((tm, n_out), lambda i: (i, 0)),
        compiler_params=pltpu.CompilerParams(
            dimension_semantics=("parallel",),
            vmem_limit_bytes=32 * 1024 * 1024,
        ),
    )(x, *weights)


# ----------------------------------------------------------------------------
# Kernel 2: block-tiled SpMM (DistChunkLayer forward):
#   out[j*tj:(j+1)*tj] = sum_i adj[j-block, i-block] @ h[i-block]
# grid = (j: output row tile [parallel], i: reduction tile [arbitrary, last]).
# The output block index ignores i -> it stays resident across the reduction
# and is used directly as the f32 accumulator.  A prefetched int32 mask flags
# non-empty (j, i) adjacency blocks; empty blocks skip the matmul.
# ----------------------------------------------------------------------------
def _chunked_spmm_kernel(mask_ref, a_ref, h_ref, o_ref):
    j = pl.program_id(0)
    i = pl.program_id(1)
    n_i = pl.num_programs(1)

    @pl.when(i == 0)
    def _():
        o_ref[...] = jnp.zeros_like(o_ref)

    @pl.when(mask_ref[j * n_i + i] != 0)
    def _():
        o_ref[...] += jnp.dot(
            a_ref[...],                          # bf16 adjacency block
            h_ref[...].astype(jnp.bfloat16),     # bf16 features, f32 accumulation
            preferred_element_type=jnp.float32,
        )


def chunked_spmm(adj_bf16, block_mask, h, tj, ti):
    N = adj_bf16.shape[0]
    F = h.shape[1]
    assert N % tj == 0 and N % ti == 0 and F % 128 == 0
    nJ, nI = N // tj, N // ti
    return pl.pallas_call(
        _chunked_spmm_kernel,
        out_shape=jax.ShapeDtypeStruct((N, F), jnp.float32),
        grid_spec=pltpu.PrefetchScalarGridSpec(
            num_scalar_prefetch=1,
            grid=(nJ, nI),
            in_specs=[
                pl.BlockSpec((tj, ti), lambda j, i, m: (j, i)),  # adj block (j, i)
                pl.BlockSpec((ti, F), lambda j, i, m: (i, 0)),   # feature tile i
            ],
            out_specs=pl.BlockSpec((tj, F), lambda j, i, m: (j, 0)),
        ),
        compiler_params=pltpu.CompilerParams(
            dimension_semantics=("parallel", "arbitrary"),
            vmem_limit_bytes=32 * 1024 * 1024,
        ),
    )(block_mask, adj_bf16, h)


# ----------------------------------------------------------------------------
# Model
# ----------------------------------------------------------------------------
def xavier_uniform(key, shape):
    fan_in, fan_out = shape
    bound = math.sqrt(6.0 / (fan_in + fan_out))
    return jax.random.uniform(key, shape, jnp.float32, -bound, bound)


class TensplitGCNLARGE:
    """JAX/Pallas port of the PyTorch TensplitGCNLARGE (single process,
    world_size = 1, so split/gather are identities)."""

    def __init__(self, key, in_dim, num_classes, adj, chunk_num,
                 hidden_dim=16, nlayers=2, world_size=1,
                 spmm_tile=(None, None), mlp_tile=None):
        N = adj.shape[0]
        assert adj.shape == (N, N)
        assert N % chunk_num == 0  # fidelity with the reference's chunking
        self.nlayers = nlayers
        self.chunk_num = chunk_num
        self.world_size = world_size
        self.num_classes = num_classes
        self.mlp_tile = mlp_tile

        # Hardware-driven SpMM tiles (decoupled from chunk_num).
        tj, ti = spmm_tile
        self.tj = tj if tj is not None else _pick_tile(N, (256, 128, 64, 32, 16, 8))
        self.ti = ti if ti is not None else _pick_tile(N, (512, 256, 128, 64, 32, 16, 8))

        # Parameters (xavier-uniform like the reference).
        keys = jax.random.split(key, nlayers)
        self.layers = [xavier_uniform(keys[0], (in_dim, hidden_dim))]
        for i in range(1, nlayers - 1):
            self.layers.append(xavier_uniform(keys[i], (hidden_dim, hidden_dim)))
        self.layers.append(xavier_uniform(keys[nlayers - 1], (hidden_dim, num_classes)))

        # Lane-dense feature width for the graph-propagation stage.
        # The reference pads hidden_features with dim_diff zero columns
        # (dim_diff = world_size - F % world_size) and crops them at the end;
        # padding with (128 - F) zero columns instead is numerically identical
        # and makes every store unmasked / every MXU N dim 128-wide.
        self.f_pad = _round_up(max(num_classes, 1), 128)
        w_last = self.layers[-1]
        pad_cols = self.f_pad - w_last.shape[1]
        w_last_padded = jnp.concatenate(
            [w_last, jnp.zeros((w_last.shape[0], pad_cols), jnp.float32)], axis=1
        ) if pad_cols > 0 else w_last
        self.padded_weights = self.layers[:-1] + [w_last_padded]

        # bf16 adjacency (HBM-bound operand) + per-block non-empty mask for
        # block-sparse skipping, laid out row-major as mask[j * nI + i].
        self.adj_bf16 = adj.astype(jnp.bfloat16)
        nJ, nI = N // self.tj, N // self.ti
        block_sums = jnp.abs(adj).reshape(nJ, self.tj, nI, self.ti).sum(axis=(1, 3))
        self.block_mask = (block_sums > 0).astype(jnp.int32).reshape(-1)

    def forward(self, features):
        # Fused DistNNLayer stack (relu between layers, none after the last),
        # output already zero-padded to f_pad columns (lane dense).
        h = fused_mlp(features, self.padded_weights, tm=self.mlp_tile)

        # nlayers applications of the chunked graph propagation
        # (DistChunkLayer; split/gather are identity for world_size == 1).
        for _ in range(len(self.layers)):
            h = chunked_spmm(self.adj_bf16, self.block_mask, h, self.tj, self.ti)

        # Crop the zero padding back to num_classes (== reference's [:, :-dim_diff]).
        return h[:, :self.num_classes]


# ----------------------------------------------------------------------------
# Main
# ----------------------------------------------------------------------------
if __name__ == "__main__":
    # Small, TPU-friendly shapes consistent with the module.
    N = 512            # number of graph nodes
    IN_DIM = 16        # g.features.size(1)
    HIDDEN = 32        # hidden_dim
    NUM_CLASSES = 8    # g.num_classes
    NLAYERS = 2
    CHUNK_NUM = 4      # g.chunk_num (model parameter; kernel tiles are separate)
    BLK = 128          # demo SpMM tile (also the block-sparsity granularity)

    key = jax.random.PRNGKey(0)
    k_feat, k_adj, k_model = jax.random.split(key, 3)

    features = jax.random.normal(k_feat, (N, IN_DIM), dtype=jnp.float32)

    # Deterministic block-banded, row-normalized adjacency standing in for the
    # sparse adj chunks of the graph (off-band 128x128 blocks are exactly zero,
    # so the block-sparse skip path is exercised).
    base = (jax.random.uniform(k_adj, (N, N)) < 0.05).astype(jnp.float32)
    base = base + jnp.eye(N, dtype=jnp.float32)
    nb = N // BLK
    rr = jnp.arange(nb)
    band = (jnp.abs(rr[:, None] - rr[None, :]) <= 1).astype(jnp.float32)
    band_full = jnp.repeat(jnp.repeat(band, BLK, axis=0), BLK, axis=1)
    adj_raw = base * band_full
    adj = adj_raw / jnp.sum(adj_raw, axis=1, keepdims=True)

    model = TensplitGCNLARGE(
        k_model, IN_DIM, NUM_CLASSES, adj, CHUNK_NUM,
        hidden_dim=HIDDEN, nlayers=NLAYERS, world_size=1,
        spmm_tile=(BLK, BLK),
    )

    out = model.forward(features)
    out = jax.block_until_ready(out)

    # Pure-JAX reference (same bf16 adjacency / bf16 feature casts, f32 accum).
    h_ref = features
    for i, w in enumerate(model.layers):
        h_ref = h_ref @ w
        if i != len(model.layers) - 1:
            h_ref = jnp.maximum(h_ref, 0.0)
    for _ in range(NLAYERS):
        h_ref = jnp.dot(model.adj_bf16, h_ref.astype(jnp.bfloat16),
                        preferred_element_type=jnp.float32)

    assert out.shape == (N, NUM_CLASSES)
    assert jnp.allclose(out, h_ref, rtol=1e-2, atol=1e-2)

    print("KERNEL_OK")
</pallas_src>

<mosaic_0001>
module attributes {stable_mosaic.version = 11 : i64} {
  func.func @_fused_mlp_kernel(%arg0: i32, %arg1: memref<512x16xf32, #tpu.memory_space<vmem>>, %arg2: memref<16x32xf32, #tpu.memory_space<vmem>>, %arg3: memref<32x128xf32, #tpu.memory_space<vmem>>, %arg4: memref<512x128xf32, #tpu.memory_space<vmem>>) attributes {dimension_semantics = [#tpu.dimension_semantics<parallel>], iteration_bounds = array<i64: 1>, scalar_prefetch = 0 : i64, scratch_operands = 0 : i64, tpu.core_type = #tpu.core_type<tc>, window_params = [{transform_indices = @transform_0, window_bounds = array<i64: 512, 16>}, {pipeline_mode = #tpu.pipeline_mode<synchronous>, transform_indices = @transform_1, window_bounds = array<i64: 16, 32>}, {pipeline_mode = #tpu.pipeline_mode<synchronous>, transform_indices = @transform_2, window_bounds = array<i64: 32, 128>}, {transform_indices = @transform_3, window_bounds = array<i64: 512, 128>}]} {
    %c0 = arith.constant 0 : index
    %c0_0 = arith.constant 0 : index
    %0 = vector.load %arg1[%c0, %c0_0] : memref<512x16xf32, #tpu.memory_space<vmem>>, vector<512x16xf32>
    %c0_1 = arith.constant 0 : index
    %c0_2 = arith.constant 0 : index
    %1 = vector.load %arg2[%c0_1, %c0_2] : memref<16x32xf32, #tpu.memory_space<vmem>>, vector<16x32xf32>
    %cst = arith.constant dense<0.000000e+00> : vector<512x32xf32>
    %2 = tpu.matmul %0, %1, %cst {dimension_numbers = #tpu.dot_dimension_numbers<[1], [0], [0], [1], [0, 0, 1, 1], [], []>} : vector<512x16xf32>, vector<16x32xf32>, vector<512x32xf32> -> vector<512x32xf32>
    %cst_3 = arith.constant 0.000000e+00 : f32
    %3 = vector.broadcast %cst_3 : f32 to vector<512x32xf32>
    %4 = arith.maximumf %2, %3 : vector<512x32xf32>
    %c0_4 = arith.constant 0 : index
    %c0_5 = arith.constant 0 : index
    %5 = vector.load %arg3[%c0_4, %c0_5] : memref<32x128xf32, #tpu.memory_space<vmem>>, vector<32x128xf32>
    %cst_6 = arith.constant dense<0.000000e+00> : vector<512x128xf32>
    %6 = tpu.matmul %4, %5, %cst_6 {dimension_numbers = #tpu.dot_dimension_numbers<[1], [0], [0], [1], [0, 0, 1, 1], [], []>} : vector<512x32xf32>, vector<32x128xf32>, vector<512x128xf32> -> vector<512x128xf32>
    %c0_7 = arith.constant 0 : index
    %c0_8 = arith.constant 0 : index
    %7 = vector.load %arg4[%c0_7, %c0_8] : memref<512x128xf32, #tpu.memory_space<vmem>>, vector<512x128xf32>
    tpu.vector_store %arg4[%c0_7, %c0_8], %6 {strides = array<i32>} : memref<512x128xf32, #tpu.memory_space<vmem>>, vector<512x128xf32>,
    return
  }
  func.func @transform_0(%arg0: i32) -> (i32, i32) {
    %c0_i32 = arith.constant 0 : i32
    %c0_i32_0 = arith.constant 0 : i32
    return %arg0, %c0_i32 : i32, i32
  }
  func.func @transform_1(%arg0: i32) -> (i32, i32) {
    %c0_i32 = arith.constant 0 : i32
    %c0_i32_0 = arith.constant 0 : i32
    %c0_i32_1 = arith.constant 0 : i32
    return %c0_i32, %c0_i32_0 : i32, i32
  }
  func.func @transform_2(%arg0: i32) -> (i32, i32) {
    %c0_i32 = arith.constant 0 : i32
    %c0_i32_0 = arith.constant 0 : i32
    %c0_i32_1 = arith.constant 0 : i32
    return %c0_i32, %c0_i32_0 : i32, i32
  }
  func.func @transform_3(%arg0: i32) -> (i32, i32) {
    %c0_i32 = arith.constant 0 : i32
    %c0_i32_0 = arith.constant 0 : i32
    return %arg0, %c0_i32 : i32, i32
  }
}

</mosaic_0001>

<llo_original>
// kernel: tpu_custom_call.1
$region0: #{tpu_custom_call.1}
  #allocation0 [shape = 'u32[]', space=smem, size = 0x4, offset = 0x4, fixed_abs, tag = 'smem constant byte address 0x4 - core index']
  #allocation1 [shape = 'u32[144,128]{1,0:T(1,128)}', space=vmem, size = 0x12000, scoped, tag = 'internal scratch']
  %s0 = inlined_call_operand.vmem [shape: f32[512,16], index: 0, kind: input, shape index: {}]
  %s1 = inlined_call_operand.vmem [shape: f32[16,32], index: 1, kind: input, shape index: {}]
  %s2 = inlined_call_operand.vmem [shape: f32[32,128], index: 2, kind: input, shape index: {}]
  %s3 = inlined_call_operand.hbm [shape: f32[512,128], index: 3, kind: output, shape index: {}]
  %s4 = sld [smem:[#allocation0]]
  $region22: #{tpu_custom_call.1} parent=0
    _
  %s6 = ssub.s32 1, %s4
  %s7 = scalar_select 0, %s6, %s4
  $region1: #{tpu_custom_call.1} parent=0
    #allocation2 [shape = 'u8[262144]{0}', space=vmem, size = 0x40000, scoped, tag = 'output window, operand 0, single buffered']
    #allocation3 [shape = 's32[1]{0}', space=sflag, size = 0x4, scoped, tag = 'scoped memory for tpu_custom_call.1']
    %8 = vsyncpa [#allocation3], 0
    // Predicated region
    $region2: #{tpu_custom_call.1} parent=1 // pred_check
      _
    $region3: #{tpu_custom_call.1} parent=1 // pred_check_branch
      %10 = sbr.rel (0) target = $region5
    $region4: #{tpu_custom_call.1} parent=1 // pred_region
      _
    $region5: #{tpu_custom_call.1} parent=1 // pred_fallthru
      _
    // Predicated region
    $region6: #{tpu_custom_call.1} parent=1 // pred_check
      _
    $region7: #{tpu_custom_call.1} parent=1 // pred_check_branch
      %12 = sbr.rel (0) target = $region9
    $region8: #{tpu_custom_call.1} parent=1 // pred_region
      _
    $region9: #{tpu_custom_call.1} parent=1 // pred_fallthru
      _
    // Predicated region
    $region10: #{tpu_custom_call.1} parent=1 // pred_check
      _
    $region11: #{tpu_custom_call.1} parent=1 // pred_check_branch
      %14 = sbr.rel (0) target = $region13
    $region12: #{tpu_custom_call.1} parent=1 // pred_region
      _
    $region13: #{tpu_custom_call.1} parent=1 // pred_fallthru
      _
    %v15 = vld [vmem:[%s0] sm:$0xff]
    %v16 = vld [vmem:[%s0 + $0x8] sm:$0xff]
    %v17 = vld [vmem:[%s0 + $0x10] sm:$0xff]
    %v18 = vld [vmem:[%s0 + $0x18] sm:$0xff]
    %v19 = vld [vmem:[%s0 + $0x20] sm:$0xff]
    %v20 = vld [vmem:[%s0 + $0x28] sm:$0xff]
    %v21 = vld [vmem:[%s0 + $0x30] sm:$0xff]
    %v22 = vld [vmem:[%s0 + $0x38] sm:$0xff]
    %v23 = vld [vmem:[%s0 + $0x40] sm:$0xff]
    %v24 = vld [vmem:[%s0 + $0x48] sm:$0xff]
    %v25 = vld [vmem:[%s0 + $0x50] sm:$0xff]
    %v26 = vld [vmem:[%s0 + $0x58] sm:$0xff]
    %v27 = vld [vmem:[%s0 + $0x60] sm:$0xff]
    %v28 = vld [vmem:[%s0 + $0x68] sm:$0xff]
    %v29 = vld [vmem:[%s0 + $0x70] sm:$0xff]
    %v30 = vld [vmem:[%s0 + $0x78] sm:$0xff]
    %v31 = vld [vmem:[%s0 + $0x80] sm:$0xff]
    %v32 = vld [vmem:[%s0 + $0x88] sm:$0xff]
    %v33 = vld [vmem:[%s0 + $0x90] sm:$0xff]
    %v34 = vld [vmem:[%s0 + $0x98] sm:$0xff]
    %v35 = vld [vmem:[%s0 + $0xa0] sm:$0xff]
    %v36 = vld [vmem:[%s0 + $0xa8] sm:$0xff]
    %v37 = vld [vmem:[%s0 + $0xb0] sm:$0xff]
    %v38 = vld [vmem:[%s0 + $0xb8] sm:$0xff]
    %v39 = vld [vmem:[%s0 + $0xc0] sm:$0xff]
    %v40 = vld [vmem:[%s0 + $0xc8] sm:$0xff]
    %v41 = vld [vmem:[%s0 + $0xd0] sm:$0xff]
    %v42 = vld [vmem:[%s0 + $0xd8] sm:$0xff]
    %v43 = vld [vmem:[%s0 + $0xe0] sm:$0xff]
    %v44 = vld [vmem:[%s0 + $0xe8] sm:$0xff]
    %v45 = vld [vmem:[%s0 + $0xf0] sm:$0xff]
    %v46 = vld [vmem:[%s0 + $0xf8] sm:$0xff]
    %v47 = vld [vmem:[%s0 + $0x100] sm:$0xff]
    %v48 = vld [vmem:[%s0 + $0x108] sm:$0xff]
    %v49 = vld [vmem:[%s0 + $0x110] sm:$0xff]
    %v50 = vld [vmem:[%s0 + $0x118] sm:$0xff]
    %v51 = vld [vmem:[%s0 + $0x120] sm:$0xff]
    %v52 = vld [vmem:[%s0 + $0x128] sm:$0xff]
    %v53 = vld [vmem:[%s0 + $0x130] sm:$0xff]
    %v54 = vld [vmem:[%s0 + $0x138] sm:$0xff]
    %v55 = vld [vmem:[%s0 + $0x140] sm:$0xff]
    %v56 = vld [vmem:[%s0 + $0x148] sm:$0xff]
    %v57 = vld [vmem:[%s0 + $0x150] sm:$0xff]
    %v58 = vld [vmem:[%s0 + $0x158] sm:$0xff]
    %v59 = vld [vmem:[%s0 + $0x160] sm:$0xff]
    %v60 = vld [vmem:[%s0 + $0x168] sm:$0xff]
    %v61 = vld [vmem:[%s0 + $0x170] sm:$0xff]
    %v62 = vld [vmem:[%s0 + $0x178] sm:$0xff]
    %v63 = vld [vmem:[%s0 + $0x180] sm:$0xff]
    %v64 = vld [vmem:[%s0 + $0x188] sm:$0xff]
    %v65 = vld [vmem:[%s0 + $0x190] sm:$0xff]
    %v66 = vld [vmem:[%s0 + $0x198] sm:$0xff]
    %v67 = vld [vmem:[%s0 + $0x1a0] sm:$0xff]
    %v68 = vld [vmem:[%s0 + $0x1a8] sm:$0xff]
    %v69 = vld [vmem:[%s0 + $0x1b0] sm:$0xff]
    %v70 = vld [vmem:[%s0 + $0x1b8] sm:$0xff]
    %v71 = vld [vmem:[%s0 + $0x1c0] sm:$0xff]
    %v72 = vld [vmem:[%s0 + $0x1c8] sm:$0xff]
    %v73 = vld [vmem:[%s0 + $0x1d0] sm:$0xff]
    %v74 = vld [vmem:[%s0 + $0x1d8] sm:$0xff]
    %v75 = vld [vmem:[%s0 + $0x1e0] sm:$0xff]
    %v76 = vld [vmem:[%s0 + $0x1e8] sm:$0xff]
    %v77 = vld [vmem:[%s0 + $0x1f0] sm:$0xff]
    %v78 = vld [vmem:[%s0 + $0x1f8] sm:$0xff]
    %v79 = vld [vmem:[%s1] sm:$0xff]
    %v80 = vld [vmem:[%s1 + $0x8] sm:$0xff]
    %vm81 = vcmask 130048
    %v83 = vsel %vm81, %v15, 0
    %v86 = vsel %vm81, %v16, 0
    %v89 = vsel %vm81, %v17, 0
    %v92 = vsel %vm81, %v18, 0
    %v95 = vsel %vm81, %v19, 0
    %v98 = vsel %vm81, %v20, 0
    %v101 = vsel %vm81, %v21, 0
    %v104 = vsel %vm81, %v22, 0
    %v107 = vsel %vm81, %v23, 0
    %v110 = vsel %vm81, %v24, 0
    %v113 = vsel %vm81, %v25, 0
    %v116 = vsel %vm81, %v26, 0
    %v119 = vsel %vm81, %v27, 0
    %v122 = vsel %vm81, %v28, 0
    %v125 = vsel %vm81, %v29, 0
    %v128 = vsel %vm81, %v30, 0
    %v131 = vsel %vm81, %v31, 0
    %v134 = vsel %vm81, %v32, 0
    %v137 = vsel %vm81, %v33, 0
    %v140 = vsel %vm81, %v34, 0
    %v143 = vsel %vm81, %v35, 0
    %v146 = vsel %vm81, %v36, 0
    %v149 = vsel %vm81, %v37, 0
    %v152 = vsel %vm81, %v38, 0
    %v155 = vsel %vm81, %v39, 0
    %v158 = vsel %vm81, %v40, 0
    %v161 = vsel %vm81, %v41, 0
    %v164 = vsel %vm81, %v42, 0
    %v167 = vsel %vm81, %v43, 0
    %v170 = vsel %vm81, %v44, 0
    %v173 = vsel %vm81, %v45, 0
    %v176 = vsel %vm81, %v46, 0
    %v179 = vsel %vm81, %v47, 0
    %v182 = vsel %vm81, %v48, 0
    %v185 = vsel %vm81, %v49, 0
    %v188 = vsel %vm81, %v50, 0
    %v191 = vsel %vm81, %v51, 0
    %v194 = vsel %vm81, %v52, 0
    %v197 = vsel %vm81, %v53, 0
    %v200 = vsel %vm81, %v54, 0
    %v203 = vsel %vm81, %v55, 0
    %v206 = vsel %vm81, %v56, 0
    %v209 = vsel %vm81, %v57, 0
    %v212 = vsel %vm81, %v58, 0
    %v215 = vsel %vm81, %v59, 0
    %v218 = vsel %vm81, %v60, 0
    %v221 = vsel %vm81, %v61, 0
    %v224 = vsel %vm81, %v62, 0
    %v227 = vsel %vm81, %v63, 0
    %v230 = vsel %vm81, %v64, 0
    %v233 = vsel %vm81, %v65, 0
    %v236 = vsel %vm81, %v66, 0
    %v239 = vsel %vm81, %v67, 0
    %v242 = vsel %vm81, %v68, 0
    %v245 = vsel %vm81, %v69, 0
    %v248 = vsel %vm81, %v70, 0
    %v251 = vsel %vm81, %v71, 0
    %v254 = vsel %vm81, %v72, 0
    %v257 = vsel %vm81, %v73, 0
    %v260 = vsel %vm81, %v74, 0
    %v263 = vsel %vm81, %v75, 0
    %v266 = vsel %vm81, %v76, 0
    %v269 = vsel %vm81, %v77, 0
    %v272 = vsel %vm81, %v78, 0
    %274 = vmatprep.subr.mxu0 0.0
    %275 = vmatpush1.msra.mxu0 %v79
    %276 = vmatprep.subr.mxu0 0.0
    %277 = vmatpush1.msra.mxu0 %v80
    %278 = vmatprep.subr.mxu0 0.0
    %279 = vmatpush1.msra.mxu0 0.0
    %280 = vmatprep.subr.mxu0 0.0
    %281 = vmatpush1.msra.mxu0 0.0
    %282 = vmatprep.subr.mxu0 0.0
    %283 = vmatpush1.msra.mxu0 0.0
    %284 = vmatprep.subr.mxu0 0.0
    %285 = vmatpush1.msra.mxu0 0.0
    %286 = vmatprep.subr.mxu0 0.0
    %287 = vmatpush1.msra.mxu0 0.0
    %288 = vmatprep.subr.mxu0 0.0
    %289 = vmatpush1.msra.mxu0 0.0
    %290 = vmatprep.subr.mxu0 0.0
    %291 = vmatpush1.msra.mxu0 0.0
    %292 = vmatprep.subr.mxu0 0.0
    %293 = vmatpush1.msra.mxu0 0.0
    %294 = vmatprep.subr.mxu0 0.0
    %295 = vmatpush1.msra.mxu0 0.0
    %296 = vmatprep.subr.mxu0 0.0
    %297 = vmatpush1.msra.mxu0 0.0
    %298 = vmatprep.subr.mxu0 0.0
    %299 = vmatpush1.msra.mxu0 0.0
    %300 = vmatprep.subr.mxu0 0.0
    %301 = vmatpush1.msra.mxu0 0.0
    %302 = vmatprep.subr.mxu0 0.0
    %303 = vmatpush1.msra.mxu0 0.0
    %304 = vmatprep.subr.mxu0 0.0
    %305 = vmatpush1.msra.mxu0 0.0
    %306 = vmatprep.subr.mxu0 0.0
    %307 = vmatpush1.msra.mxu0 0.0
    %308 = vmatprep.subr.mxu0 0.0
    %309 = vmatpush1.msra.mxu0 0.0
    %310 = vmatprep.subr.mxu0 0.0
    %311 = vmatpush1.msra.mxu0 0.0
    %312 = vmatprep.subr.mxu0 0.0
    %313 = vmatpush1.msra.mxu0 0.0
    %314 = vmatprep.subr.mxu0 0.0
    %315 = vmatpush1.msra.mxu0 0.0
    %316 = vmatprep.subr.mxu0 0.0
    %317 = vmatpush1.msra.mxu0 0.0
    %318 = vmatprep.subr.mxu0 0.0
    %319 = vmatpush1.msra.mxu0 0.0
    %320 = vmatprep.subr.mxu0 0.0
    %321 = vmatpush1.msra.mxu0 0.0
    %322 = vmatprep.subr.mxu0 0.0
    %323 = vmatpush1.msra.mxu0 0.0
    %324 = vmatprep.subr.mxu0 0.0
    %325 = vmatpush1.msra.mxu0 0.0
    %326 = vmatprep.subr.mxu0 0.0
    %327 = vmatpush1.msra.mxu0 0.0
    %328 = vmatprep.subr.mxu0 0.0
    %329 = vmatpush1.msra.mxu0 0.0
    %330 = vmatprep.subr.mxu0 0.0
    %331 = vmatpush1.msra.mxu0 0.0
    %332 = vmatprep.subr.mxu0 0.0
    %333 = vmatpush1.msra.mxu0 0.0
    %334 = vmatprep.subr.mxu0 0.0
    %335 = vmatpush1.msra.mxu0 0.0
    %336 = vmatprep.subr.mxu0 0.0
    %337 = vmatpush1.msra.mxu0 0.0
    %338 = vmatprep.mubr.f32.mxu0 0.0
    %339 = vmatmul.mubr.f32.gmra.mrb[0].mxu0 %v83
    %v340 = vpop.f32.mrb[0].mxu0
    %v341 = vadd.f32 0.0, %v340
    %v342 = vpop.f32.mrb[0].mxu0
    %343 = vmatprep.mubr.f32.mxu0 0.0
    %344 = vmatmul.mubr.f32.gmra.mrb[0].mxu0 %v86
    %v345 = vpop.f32.mrb[0].mxu0
    %v346 = vadd.f32 0.0, %v345
    %v347 = vpop.f32.mrb[0].mxu0
    %348 = vmatprep.mubr.f32.mxu0 0.0
    %349 = vmatmul.mubr.f32.gmra.mrb[0].mxu0 %v89
    %v350 = vpop.f32.mrb[0].mxu0
    %v351 = vadd.f32 0.0, %v350
    %v352 = vpop.f32.mrb[0].mxu0
    %353 = vmatprep.mubr.f32.mxu0 0.0
    %354 = vmatmul.mubr.f32.gmra.mrb[0].mxu0 %v92
    %v355 = vpop.f32.mrb[0].mxu0
    %v356 = vadd.f32 0.0, %v355
    %v357 = vpop.f32.mrb[0].mxu0
    %358 = vmatprep.mubr.f32.mxu0 0.0
    %359 = vmatmul.mubr.f32.gmra.mrb[0].mxu0 %v95
    %v360 = vpop.f32.mrb[0].mxu0
    %v361 = vadd.f32 0.0, %v360
    %v362 = vpop.f32.mrb[0].mxu0
    %363 = vmatprep.mubr.f32.mxu0 0.0
    %364 = vmatmul.mubr.f32.gmra.mrb[0].mxu0 %v98
    %v365 = vpop.f32.mrb[0].mxu0
    %v366 = vadd.f32 0.0, %v365
    %v367 = vpop.f32.mrb[0].mxu0
    %368 = vmatprep.mubr.f32.mxu0 0.0
    %369 = vmatmul.mubr.f32.gmra.mrb[0].mxu0 %v101
    %v370 = vpop.f32.mrb[0].mxu0
    %v371 = vadd.f32 0.0, %v370
    %v372 = vpop.f32.mrb[0].mxu0
    %373 = vmatprep.mubr.f32.mxu0 0.0
    %374 = vmatmul.mubr.f32.gmra.mrb[0].mxu0 %v104
    %v375 = vpop.f32.mrb[0].mxu0
    %v376 = vadd.f32 0.0, %v375
    %v377 = vpop.f32.mrb[0].mxu0
    %378 = vmatprep.mubr.f32.mxu0 0.0
    %379 = vmatmul.mubr.f32.gmra.mrb[0].mxu0 %v107
    %v380 = vpop.f32.mrb[0].mxu0
    %v381 = vadd.f32 0.0, %v380
    %v382 = vpop.f32.mrb[0].mxu0
    %383 = vmatprep.mubr.f32.mxu0 0.0
    %384 = vmatmul.mubr.f32.gmra.mrb[0].mxu0 %v110
    %v385 = vpop.f32.mrb[0].mxu0
    %v386 = vadd.f32 0.0, %v385
    %v387 = vpop.f32.mrb[0].mxu0
    %388 = vmatprep.mubr.f32.mxu0 0.0
    %389 = vmatmul.mubr.f32.gmra.mrb[0].mxu0 %v113
    %v390 = vpop.f32.mrb[0].mxu0
    %v391 = vadd.f32 0.0, %v390
    %v392 = vpop.f32.mrb[0].mxu0
    %393 = vmatprep.mubr.f32.mxu0 0.0
    %394 = vmatmul.mubr.f32.gmra.mrb[0].mxu0 %v116
    %v395 = vpop.f32.mrb[0].mxu0
    %v396 = vadd.f32 0.0, %v395
    %v397 = vpop.f32.mrb[0].mxu0
    %398 = vmatprep.mubr.f32.mxu0 0.0
    %399 = vmatmul.mubr.f32.gmra.mrb[0].mxu0 %v119
    %v400 = vpop.f32.mrb[0].mxu0
    %v401 = vadd.f32 0.0, %v400
    %v402 = vpop.f32.mrb[0].mxu0
    %403 = vmatprep.mubr.f32.mxu0 0.0
    %404 = vmatmul.mubr.f32.gmra.mrb[0].mxu0 %v122
    %v405 = vpop.f32.mrb[0].mxu0
    %v406 = vadd.f32 0.0, %v405
    %v407 = vpop.f32.mrb[0].mxu0
    %408 = vmatprep.mubr.f32.mxu0 0.0
    %409 = vmatmul.mubr.f32.gmra.mrb[0].mxu0 %v125
    %v410 = vpop.f32.mrb[0].mxu0
    %v411 = vadd.f32 0.0, %v410
    %v412 = vpop.f32.mrb[0].mxu0
    %413 = vmatprep.mubr.f32.mxu0 0.0
    %414 = vmatmul.mubr.f32.gmra.mrb[0].mxu0 %v128
    %v415 = vpop.f32.mrb[0].mxu0
    %v416 = vadd.f32 0.0, %v415
    %v417 = vpop.f32.mrb[0].mxu0
    %418 = vmatprep.mubr.f32.mxu0 0.0
    %419 = vmatmul.mubr.f32.gmra.mrb[0].mxu0 %v131
    %v420 = vpop.f32.mrb[0].mxu0
    %v421 = vadd.f32 0.0, %v420
    %v422 = vpop.f32.mrb[0].mxu0
    %423 = vmatprep.mubr.f32.mxu0 0.0
    %424 = vmatmul.mubr.f32.gmra.mrb[0].mxu0 %v134
    %v425 = vpop.f32.mrb[0].mxu0
    %v426 = vadd.f32 0.0, %v425
    %v427 = vpop.f32.mrb[0].mxu0
    %428 = vmatprep.mubr.f32.mxu0 0.0
    %429 = vmatmul.mubr.f32.gmra.mrb[0].mxu0 %v137
    %v430 = vpop.f32.mrb[0].mxu0
    %v431 = vadd.f32 0.0, %v430
    %v432 = vpop.f32.mrb[0].mxu0
    %433 = vmatprep.mubr.f32.mxu0 0.0
    %434 = vmatmul.mubr.f32.gmra.mrb[0].mxu0 %v140
    %v435 = vpop.f32.mrb[0].mxu0
    %v436 = vadd.f32 0.0, %v435
    %v437 = vpop.f32.mrb[0].mxu0
    %438 = vmatprep.mubr.f32.mxu0 0.0
    %439 = vmatmul.mubr.f32.gmra.mrb[0].mxu0 %v143
    %v440 = vpop.f32.mrb[0].mxu0
    %v441 = vadd.f32 0.0, %v440
    %v442 = vpop.f32.mrb[0].mxu0
    %443 = vmatprep.mubr.f32.mxu0 0.0
    %444 = vmatmul.mubr.f32.gmra.mrb[0].mxu0 %v146
    %v445 = vpop.f32.mrb[0].mxu0
    %v446 = vadd.f32 0.0, %v445
    %v447 = vpop.f32.mrb[0].mxu0
    %448 = vmatprep.mubr.f32.mxu0 0.0
    %449 = vmatmul.mubr.f32.gmra.mrb[0].mxu0 %v149
    %v450 = vpop.f32.mrb[0].mxu0
    %v451 = vadd.f32 0.0, %v450
    %v452 = vpop.f32.mrb[0].mxu0
    %453 = vmatprep.mubr.f32.mxu0 0.0
    %454 = vmatmul.mubr.f32.gmra.mrb[0].mxu0 %v152
    %v455 = vpop.f32.mrb[0].mxu0
    %v456 = vadd.f32 0.0, %v455
    %v457 = vpop.f32.mrb[0].mxu0
    %458 = vmatprep.mubr.f32.mxu0 0.0
    %459 = vmatmul.mubr.f32.gmra.mrb[0].mxu0 %v155
    %v460 = vpop.f32.mrb[0].mxu0
    %v461 = vadd.f32 0.0, %v460
    %v462 = vpop.f32.mrb[0].mxu0
    %463 = vmatprep.mubr.f32.mxu0 0.0
    %464 = vmatmul.mubr.f32.gmra.mrb[0].mxu0 %v158
    %v465 = vpop.f32.mrb[0].mxu0
    %v466 = vadd.f32 0.0, %v465
    %v467 = vpop.f32.mrb[0].mxu0
    %468 = vmatprep.mubr.f32.mxu0 0.0
    %469 = vmatmul.mubr.f32.gmra.mrb[0].mxu0 %v161
    %v470 = vpop.f32.mrb[0].mxu0
    %v471 = vadd.f32 0.0, %v470
    %v472 = vpop.f32.mrb[0].mxu0
    %473 = vmatprep.mubr.f32.mxu0 0.0
    %474 = vmatmul.mubr.f32.gmra.mrb[0].mxu0 %v164
    %v475 = vpop.f32.mrb[0].mxu0
    %v476 = vadd.f32 0.0, %v475
    %v477 = vpop.f32.mrb[0].mxu0
    %478 = vmatprep.mubr.f32.mxu0 0.0
    %479 = vmatmul.mubr.f32.gmra.mrb[0].mxu0 %v167
    %v480 = vpop.f32.mrb[0].mxu0
    %v481 = vadd.f32 0.0, %v480
    %v482 = vpop.f32.mrb[0].mxu0
    %483 = vmatprep.mubr.f32.mxu0 0.0
    %484 = vmatmul.mubr.f32.gmra.mrb[0].mxu0 %v170
    %v485 = vpop.f32.mrb[0].mxu0
    %v486 = vadd.f32 0.0, %v485
    %v487 = vpop.f32.mrb[0].mxu0
    %488 = vmatprep.mubr.f32.mxu0 0.0
    %489 = vmatmul.mubr.f32.gmra.mrb[0].mxu0 %v173
    %v490 = vpop.f32.mrb[0].mxu0
    %v491 = vadd.f32 0.0, %v490
    %v492 = vpop.f32.mrb[0].mxu0
    %493 = vmatprep.mubr.f32.mxu0 0.0
    %494 = vmatmul.mubr.f32.gmra.mrb[0].mxu0 %v176
    %v495 = vpop.f32.mrb[0].mxu0
    %v496 = vadd.f32 0.0, %v495
    %v497 = vpop.f32.mrb[0].mxu0
    %498 = vmatprep.mubr.f32.mxu0 0.0
    %499 = vmatmul.mubr.f32.gmra.mrb[0].mxu0 %v179
    %v500 = vpop.f32.mrb[0].mxu0
    %v501 = vadd.f32 0.0, %v500
    %v502 = vpop.f32.mrb[0].mxu0
    %503 = vmatprep.mubr.f32.mxu0 0.0
    %504 = vmatmul.mubr.f32.gmra.mrb[0].mxu0 %v182
    %v505 = vpop.f32.mrb[0].mxu0
    %v506 = vadd.f32 0.0, %v505
    %v507 = vpop.f32.mrb[0].mxu0
    %508 = vmatprep.mubr.f32.mxu0 0.0
    %509 = vmatmul.mubr.f32.gmra.mrb[0].mxu0 %v185
    %v510 = vpop.f32.mrb[0].mxu0
    %v511 = vadd.f32 0.0, %v510
    %v512 = vpop.f32.mrb[0].mxu0
    %513 = vmatprep.mubr.f32.mxu0 0.0
    %514 = vmatmul.mubr.f32.gmra.mrb[0].mxu0 %v188
    %v515 = vpop.f32.mrb[0].mxu0
    %v516 = vadd.f32 0.0, %v515
    %v517 = vpop.f32.mrb[0].mxu0
    %518 = vmatprep.mubr.f32.mxu0 0.0
    %519 = vmatmul.mubr.f32.gmra.mrb[0].mxu0 %v191
    %v520 = vpop.f32.mrb[0].mxu0
    %v521 = vadd.f32 0.0, %v520
    %v522 = vpop.f32.mrb[0].mxu0
    %523 = vmatprep.mubr.f32.mxu0 0.0
    %524 = vmatmul.mubr.f32.gmra.mrb[0].mxu0 %v194
    %v525 = vpop.f32.mrb[0].mxu0
    %v526 = vadd.f32 0.0, %v525
    %v527 = vpop.f32.mrb[0].mxu0
    %528 = vmatprep.mubr.f32.mxu0 0.0
    %529 = vmatmul.mubr.f32.gmra.mrb[0].mxu0 %v197
    %v530 = vpop.f32.mrb[0].mxu0
    %v531 = vadd.f32 0.0, %v530
    %v532 = vpop.f32.mrb[0].mxu0
    %533 = vmatprep.mubr.f32.mxu0 0.0
    %534 = vmatmul.mubr.f32.gmra.mrb[0].mxu0 %v200
    %v535 = vpop.f32.mrb[0].mxu0
    %v536 = vadd.f32 0.0, %v535
    %v537 = vpop.f32.mrb[0].mxu0
    %538 = vmatprep.mubr.f32.mxu0 0.0
    %539 = vmatmul.mubr.f32.gmra.mrb[0].mxu0 %v203
    %v540 = vpop.f32.mrb[0].mxu0
    %v541 = vadd.f32 0.0, %v540
    %v542 = vpop.f32.mrb[0].mxu0
    %543 = vmatprep.mubr.f32.mxu0 0.0
    %544 = vmatmul.mubr.f32.gmra.mrb[0].mxu0 %v206
    %v545 = vpop.f32.mrb[0].mxu0
    %v546 = vadd.f32 0.0, %v545
    %v547 = vpop.f32.mrb[0].mxu0
    %548 = vmatprep.mubr.f32.mxu0 0.0
    %549 = vmatmul.mubr.f32.gmra.mrb[0].mxu0 %v209
    %v550 = vpop.f32.mrb[0].mxu0
    %v551 = vadd.f32 0.0, %v550
    %v552 = vpop.f32.mrb[0].mxu0
    %553 = vmatprep.mubr.f32.mxu0 0.0
    %554 = vmatmul.mubr.f32.gmra.mrb[0].mxu0 %v212
    %v555 = vpop.f32.mrb[0].mxu0
    %v556 = vadd.f32 0.0, %v555
    %v557 = vpop.f32.mrb[0].mxu0
    %558 = vmatprep.mubr.f32.mxu0 0.0
    %559 = vmatmul.mubr.f32.gmra.mrb[0].mxu0 %v215
    %v560 = vpop.f32.mrb[0].mxu0
    %v561 = vadd.f32 0.0, %v560
    %v562 = vpop.f32.mrb[0].mxu0
    %563 = vmatprep.mubr.f32.mxu0 0.0
    %564 = vmatmul.mubr.f32.gmra.mrb[0].mxu0 %v218
    %v565 = vpop.f32.mrb[0].mxu0
    %v566 = vadd.f32 0.0, %v565
    %v567 = vpop.f32.mrb[0].mxu0
    %568 = vmatprep.mubr.f32.mxu0 0.0
    %569 = vmatmul.mubr.f32.gmra.mrb[0].mxu0 %v221
    %v570 = vpop.f32.mrb[0].mxu0
    %v571 = vadd.f32 0.0, %v570
    %v572 = vpop.f32.mrb[0].mxu0
    %573 = vmatprep.mubr.f32.mxu0 0.0
    %574 = vmatmul.mubr.f32.gmra.mrb[0].mxu0 %v224
    %v575 = vpop.f32.mrb[0].mxu0
    %v576 = vadd.f32 0.0, %v575
    %v577 = vpop.f32.mrb[0].mxu0
    %578 = vmatprep.mubr.f32.mxu0 0.0
    %579 = vmatmul.mubr.f32.gmra.mrb[0].mxu0 %v227
    %v580 = vpop.f32.mrb[0].mxu0
    %v581 = vadd.f32 0.0, %v580
    %v582 = vpop.f32.mrb[0].mxu0
    %583 = vmatprep.mubr.f32.mxu0 0.0
    %584 = vmatmul.mubr.f32.gmra.mrb[0].mxu0 %v230
    %v585 = vpop.f32.mrb[0].mxu0
    %v586 = vadd.f32 0.0, %v585
    %v587 = vpop.f32.mrb[0].mxu0
    %588 = vmatprep.mubr.f32.mxu0 0.0
    %589 = vmatmul.mubr.f32.gmra.mrb[0].mxu0 %v233
    %v590 = vpop.f32.mrb[0].mxu0
    %v591 = vadd.f32 0.0, %v590
    %v592 = vpop.f32.mrb[0].mxu0
    %593 = vmatprep.mubr.f32.mxu0 0.0
    %594 = vmatmul.mubr.f32.gmra.mrb[0].mxu0 %v236
    %v595 = vpop.f32.mrb[0].mxu0
    %v596 = vadd.f32 0.0, %v595
    %v597 = vpop.f32.mrb[0].mxu0
    %598 = vmatprep.mubr.f32.mxu0 0.0
    %599 = vmatmul.mubr.f32.gmra.mrb[0].mxu0 %v239
    %v600 = vpop.f32.mrb[0].mxu0
    %v601 = vadd.f32 0.0, %v600
    %v602 = vpop.f32.mrb[0].mxu0
    %603 = vmatprep.mubr.f32.mxu0 0.0
    %604 = vmatmul.mubr.f32.gmra.mrb[0].mxu0 %v242
    %v605 = vpop.f32.mrb[0].mxu0
    %v606 = vadd.f32 0.0, %v605
    %v607 = vpop.f32.mrb[0].mxu0
    %608 = vmatprep.mubr.f32.mxu0 0.0
    %609 = vmatmul.mubr.f32.gmra.mrb[0].mxu0 %v245
    %v610 = vpop.f32.mrb[0].mxu0
    %v611 = vadd.f32 0.0, %v610
    %v612 = vpop.f32.mrb[0].mxu0
    %613 = vmatprep.mubr.f32.mxu0 0.0
    %614 = vmatmul.mubr.f32.gmra.mrb[0].mxu0 %v248
    %v615 = vpop.f32.mrb[0].mxu0
    %v616 = vadd.f32 0.0, %v615
    %v617 = vpop.f32.mrb[0].mxu0
    %618 = vmatprep.mubr.f32.mxu0 0.0
    %619 = vmatmul.mubr.f32.gmra.mrb[0].mxu0 %v251
    %v620 = vpop.f32.mrb[0].mxu0
    %v621 = vadd.f32 0.0, %v620
    %v622 = vpop.f32.mrb[0].mxu0
    %623 = vmatprep.mubr.f32.mxu0 0.0
    %624 = vmatmul.mubr.f32.gmra.mrb[0].mxu0 %v254
    %v625 = vpop.f32.mrb[0].mxu0
    %v626 = vadd.f32 0.0, %v625
    %v627 = vpop.f32.mrb[0].mxu0
    %628 = vmatprep.mubr.f32.mxu0 0.0
    %629 = vmatmul.mubr.f32.gmra.mrb[0].mxu0 %v257
    %v630 = vpop.f32.mrb[0].mxu0
    %v631 = vadd.f32 0.0, %v630
    %v632 = vpop.f32.mrb[0].mxu0
    %633 = vmatprep.mubr.f32.mxu0 0.0
    %634 = vmatmul.mubr.f32.gmra.mrb[0].mxu0 %v260
    %v635 = vpop.f32.mrb[0].mxu0
    %v636 = vadd.f32 0.0, %v635
    %v637 = vpop.f32.mrb[0].mxu0
    %638 = vmatprep.mubr.f32.mxu0 0.0
    %639 = vmatmul.mubr.f32.gmra.mrb[0].mxu0 %v263
    %v640 = vpop.f32.mrb[0].mxu0
    %v641 = vadd.f32 0.0, %v640
    %v642 = vpop.f32.mrb[0].mxu0
    %643 = vmatprep.mubr.f32.mxu0 0.0
    %644 = vmatmul.mubr.f32.gmra.mrb[0].mxu0 %v266
    %v645 = vpop.f32.mrb[0].mxu0
    %v646 = vadd.f32 0.0, %v645
    %v647 = vpop.f32.mrb[0].mxu0
    %648 = vmatprep.mubr.f32.mxu0 0.0
    %649 = vmatmul.mubr.f32.gmra.mrb[0].mxu0 %v269
    %v650 = vpop.f32.mrb[0].mxu0
    %v651 = vadd.f32 0.0, %v650
    %v652 = vpop.f32.mrb[0].mxu0
    %653 = vmatprep.mubr.f32.mxu0 0.0
    %654 = vmatmul.mubr.f32.gmra.mrb[0].mxu0 %v272
    %v655 = vpop.f32.mrb[0].mxu0
    %v656 = vadd.f32 0.0, %v655
    %v657 = vpop.f32.mrb[0].mxu0
    %658 = vdwg.mxu0
    %v659 = vmax.f32 %v341, 0.0
    %v660 = vmax.f32 %v346, 0.0
    %v661 = vmax.f32 %v351, 0.0
    %v662 = vmax.f32 %v356, 0.0
    %v663 = vmax.f32 %v361, 0.0
    %v664 = vmax.f32 %v366, 0.0
    %v665 = vmax.f32 %v371, 0.0
    %v666 = vmax.f32 %v376, 0.0
    %v667 = vmax.f32 %v381, 0.0
    %v668 = vmax.f32 %v386, 0.0
    %v669 = vmax.f32 %v391, 0.0
    %v670 = vmax.f32 %v396, 0.0
    %v671 = vmax.f32 %v401, 0.0
    %v672 = vmax.f32 %v406, 0.0
    %v673 = vmax.f32 %v411, 0.0
    %v674 = vmax.f32 %v416, 0.0
    %v675 = vmax.f32 %v421, 0.0
    %v676 = vmax.f32 %v426, 0.0
    %v677 = vmax.f32 %v431, 0.0
    %v678 = vmax.f32 %v436, 0.0
    %v679 = vmax.f32 %v441, 0.0
    %v680 = vmax.f32 %v446, 0.0
    %v681 = vmax.f32 %v451, 0.0
    %v682 = vmax.f32 %v456, 0.0
    %v683 = vmax.f32 %v461, 0.0
    %v684 = vmax.f32 %v466, 0.0
    %v685 = vmax.f32 %v471, 0.0
    %v686 = vmax.f32 %v476, 0.0
    %v687 = vmax.f32 %v481, 0.0
    %v688 = vmax.f32 %v486, 0.0
    %v689 = vmax.f32 %v491, 0.0
    %v690 = vmax.f32 %v496, 0.0
    %v691 = vmax.f32 %v501, 0.0
    %v692 = vmax.f32 %v506, 0.0
    %v693 = vmax.f32 %v511, 0.0
    %v694 = vmax.f32 %v516, 0.0
    %v695 = vmax.f32 %v521, 0.0
    %v696 = vmax.f32 %v526, 0.0
    %v697 = vmax.f32 %v531, 0.0
    %v698 = vmax.f32 %v536, 0.0
    %v699 = vmax.f32 %v541, 0.0
    %v700 = vmax.f32 %v546, 0.0
    %v701 = vmax.f32 %v551, 0.0
    %v702 = vmax.f32 %v556, 0.0
    %v703 = vmax.f32 %v561, 0.0
    %v704 = vmax.f32 %v566, 0.0
    %v705 = vmax.f32 %v571, 0.0
    %v706 = vmax.f32 %v576, 0.0
    %v707 = vmax.f32 %v581, 0.0
    %v708 = vmax.f32 %v586, 0.0
    %v709 = vmax.f32 %v591, 0.0
    %v710 = vmax.f32 %v596, 0.0
    %v711 = vmax.f32 %v601, 0.0
    %v712 = vmax.f32 %v606, 0.0
    %v713 = vmax.f32 %v611, 0.0
    %v714 = vmax.f32 %v616, 0.0
    %v715 = vmax.f32 %v621, 0.0
    %v716 = vmax.f32 %v626, 0.0
    %v717 = vmax.f32 %v631, 0.0
    %v718 = vmax.f32 %v636, 0.0
    %v719 = vmax.f32 %v641, 0.0
    %v720 = vmax.f32 %v646, 0.0
    %v721 = vmax.f32 %v651, 0.0
    %v722 = vmax.f32 %v656, 0.0
    %v723 = vld [vmem:[%s2] sm:$0xff]
    %v724 = vld [vmem:[%s2 + $0x8] sm:$0xff]
    %v725 = vld [vmem:[%s2 + $0x10] sm:$0xff]
    %v726 = vld [vmem:[%s2 + $0x18] sm:$0xff]
    %vm727 = vcmask 261120
    %v729 = vsel %vm727, %v659, 0
    %v732 = vsel %vm727, %v660, 0
    %v735 = vsel %vm727, %v661, 0
    %v738 = vsel %vm727, %v662, 0
    %v741 = vsel %vm727, %v663, 0
    %v744 = vsel %vm727, %v664, 0
    %v747 = vsel %vm727, %v665, 0
    %v750 = vsel %vm727, %v666, 0
    %v753 = vsel %vm727, %v667, 0
    %v756 = vsel %vm727, %v668, 0
    %v759 = vsel %vm727, %v669, 0
    %v762 = vsel %vm727, %v670, 0
    %v765 = vsel %vm727, %v671, 0
    %v768 = vsel %vm727, %v672, 0
    %v771 = vsel %vm727, %v673, 0
    %v774 = vsel %vm727, %v674, 0
    %v777 = vsel %vm727, %v675, 0
    %v780 = vsel %vm727, %v676, 0
    %v783 = vsel %vm727, %v677, 0
    %v786 = vsel %vm727, %v678, 0
    %v789 = vsel %vm727, %v679, 0
    %v792 = vsel %vm727, %v680, 0
    %v795 = vsel %vm727, %v681, 0
    %v798 = vsel %vm727, %v682, 0
    %v801 = vsel %vm727, %v683, 0
    %v804 = vsel %vm727, %v684, 0
    %v807 = vsel %vm727, %v685, 0
    %v810 = vsel %vm727, %v686, 0
    %v813 = vsel %vm727, %v687, 0
    %v816 = vsel %vm727, %v688, 0
    %v819 = vsel %vm727, %v689, 0
    %v822 = vsel %vm727, %v690, 0
    %v825 = vsel %vm727, %v691, 0
    %v828 = vsel %vm727, %v692, 0
    %v831 = vsel %vm727, %v693, 0
    %v834 = vsel %vm727, %v694, 0
    %v837 = vsel %vm727, %v695, 0
    %v840 = vsel %vm727, %v696, 0
    %v843 = vsel %vm727, %v697, 0
    %v846 = vsel %vm727, %v698, 0
    %v849 = vsel %vm727, %v699, 0
    %v852 = vsel %vm727, %v700, 0
    %v855 = vsel %vm727, %v701, 0
    %v858 = vsel %vm727, %v702, 0
    %v861 = vsel %vm727, %v703, 0
    %v864 = vsel %vm727, %v704, 0
    %v867 = vsel %vm727, %v705, 0
    %v870 = vsel %vm727, %v706, 0
    %v873 = vsel %vm727, %v707, 0
    %v876 = vsel %vm727, %v708, 0
    %v879 = vsel %vm727, %v709, 0
    %v882 = vsel %vm727, %v710, 0
    %v885 = vsel %vm727, %v711, 0
    %v888 = vsel %vm727, %v712, 0
    %v891 = vsel %vm727, %v713, 0
    %v894 = vsel %vm727, %v714, 0
    %v897 = vsel %vm727, %v715, 0
    %v900 = vsel %vm727, %v716, 0
    %v903 = vsel %vm727, %v717, 0
    %v906 = vsel %vm727, %v718, 0
    %v909 = vsel %vm727, %v719, 0
    %v912 = vsel %vm727, %v720, 0
    %v915 = vsel %vm727, %v721, 0
    %v918 = vsel %vm727, %v722, 0
    %920 = vmatprep.subr.mxu0 0.0
    %921 = vmatpush1.msra.mxu0 %v723
    %922 = vmatprep.subr.mxu0 0.0
    %923 = vmatpush1.msra.mxu0 %v724
    %924 = vmatprep.subr.mxu0 0.0
    %925 = vmatpush1.msra.mxu0 %v725
    %926 = vmatprep.subr.mxu0 0.0
    %927 = vmatpush1.msra.mxu0 %v726
    %928 = vmatprep.subr.mxu0 0.0
    %929 = vmatpush1.msra.mxu0 0.0
    %930 = vmatprep.subr.mxu0 0.0
    %931 = vmatpush1.msra.mxu0 0.0
    %932 = vmatprep.subr.mxu0 0.0
    %933 = vmatpush1.msra.mxu0 0.0
    %934 = vmatprep.subr.mxu0 0.0
    %935 = vmatpush1.msra.mxu0 0.0
    %936 = vmatprep.subr.mxu0 0.0
    %937 = vmatpush1.msra.mxu0 0.0
    %938 = vmatprep.subr.mxu0 0.0
    %939 = vmatpush1.msra.mxu0 0.0
    %940 = vmatprep.subr.mxu0 0.0
    %941 = vmatpush1.msra.mxu0 0.0
    %942 = vmatprep.subr.mxu0 0.0
    %943 = vmatpush1.msra.mxu0 0.0
    %944 = vmatprep.subr.mxu0 0.0
    %945 = vmatpush1.msra.mxu0 0.0
    %946 = vmatprep.subr.mxu0 0.0
    %947 = vmatpush1.msra.mxu0 0.0
    %948 = vmatprep.subr.mxu0 0.0
    %949 = vmatpush1.msra.mxu0 0.0
    %950 = vmatprep.subr.mxu0 0.0
    %951 = vmatpush1.msra.mxu0 0.0
    %952 = vmatprep.subr.mxu0 0.0
    %953 = vmatpush1.msra.mxu0 0.0
    %954 = vmatprep.subr.mxu0 0.0
    %955 = vmatpush1.msra.mxu0 0.0
    %956 = vmatprep.subr.mxu0 0.0
    %957 = vmatpush1.msra.mxu0 0.0
    %958 = vmatprep.subr.mxu0 0.0
    %959 = vmatpush1.msra.mxu0 0.0
    %960 = vmatprep.subr.mxu0 0.0
    %961 = vmatpush1.msra.mxu0 0.0
    %962 = vmatprep.subr.mxu0 0.0
    %963 = vmatpush1.msra.mxu0 0.0
    %964 = vmatprep.subr.mxu0 0.0
    %965 = vmatpush1.msra.mxu0 0.0
    %966 = vmatprep.subr.mxu0 0.0
    %967 = vmatpush1.msra.mxu0 0.0
    %968 = vmatprep.subr.mxu0 0.0
    %969 = vmatpush1.msra.mxu0 0.0
    %970 = vmatprep.subr.mxu0 0.0
    %971 = vmatpush1.msra.mxu0 0.0
    %972 = vmatprep.subr.mxu0 0.0
    %973 = vmatpush1.msra.mxu0 0.0
    %974 = vmatprep.subr.mxu0 0.0
    %975 = vmatpush1.msra.mxu0 0.0
    %976 = vmatprep.subr.mxu0 0.0
    %977 = vmatpush1.msra.mxu0 0.0
    %978 = vmatprep.subr.mxu0 0.0
    %979 = vmatpush1.msra.mxu0 0.0
    %980 = vmatprep.subr.mxu0 0.0
    %981 = vmatpush1.msra.mxu0 0.0
    %982 = vmatprep.subr.mxu0 0.0
    %983 = vmatpush1.msra.mxu0 0.0
    %984 = vmatprep.mubr.f32.mxu0 0.0
    %985 = vmatmul.mubr.f32.gmra.mrb[0].mxu0 %v729
    %v986 = vpop.f32.mrb[0].mxu0
    %v987 = vadd.f32 0.0, %v986
    %v988 = vpop.f32.mrb[0].mxu0
    %989 = vmatprep.mubr.f32.mxu0 0.0
    %990 = vmatmul.mubr.f32.gmra.mrb[0].mxu0 %v732
    %v991 = vpop.f32.mrb[0].mxu0
    %v992 = vadd.f32 0.0, %v991
    %v993 = vpop.f32.mrb[0].mxu0
    %994 = vmatprep.mubr.f32.mxu0 0.0
    %995 = vmatmul.mubr.f32.gmra.mrb[0].mxu0 %v735
    %v996 = vpop.f32.mrb[0].mxu0
    %v997 = vadd.f32 0.0, %v996
    %v998 = vpop.f32.mrb[0].mxu0
    %999 = vmatprep.mubr.f32.mxu0 0.0
    %1000 = vmatmul.mubr.f32.gmra.mrb[0].mxu0 %v738
    %v1001 = vpop.f32.mrb[0].mxu0
    %v1002 = vadd.f32 0.0, %v1001
    %v1003 = vpop.f32.mrb[0].mxu0
    %1004 = vmatprep.mubr.f32.mxu0 0.0
    %1005 = vmatmul.mubr.f32.gmra.mrb[0].mxu0 %v741
    %v1006 = vpop.f32.mrb[0].mxu0
    %v1007 = vadd.f32 0.0, %v1006
    %v1008 = vpop.f32.mrb[0].mxu0
    %1009 = vmatprep.mubr.f32.mxu0 0.0
    %1010 = vmatmul.mubr.f32.gmra.mrb[0].mxu0 %v744
    %v1011 = vpop.f32.mrb[0].mxu0
    %v1012 = vadd.f32 0.0, %v1011
    %v1013 = vpop.f32.mrb[0].mxu0
    %1014 = vmatprep.mubr.f32.mxu0 0.0
    %1015 = vmatmul.mubr.f32.gmra.mrb[0].mxu0 %v747
    %v1016 = vpop.f32.mrb[0].mxu0
    %v1017 = vadd.f32 0.0, %v1016
    %v1018 = vpop.f32.mrb[0].mxu0
    %1019 = vmatprep.mubr.f32.mxu0 0.0
    %1020 = vmatmul.mubr.f32.gmra.mrb[0].mxu0 %v750
    %v1021 = vpop.f32.mrb[0].mxu0
    %v1022 = vadd.f32 0.0, %v1021
    %v1023 = vpop.f32.mrb[0].mxu0
    %1024 = vmatprep.mubr.f32.mxu0 0.0
    %1025 = vmatmul.mubr.f32.gmra.mrb[0].mxu0 %v753
    %v1026 = vpop.f32.mrb[0].mxu0
    %v1027 = vadd.f32 0.0, %v1026
    %v1028 = vpop.f32.mrb[0].mxu0
    %1029 = vmatprep.mubr.f32.mxu0 0.0
    %1030 = vmatmul.mubr.f32.gmra.mrb[0].mxu0 %v756
    %v1031 = vpop.f32.mrb[0].mxu0
    %v1032 = vadd.f32 0.0, %v1031
    %v1033 = vpop.f32.mrb[0].mxu0
    %1034 = vmatprep.mubr.f32.mxu0 0.0
    %1035 = vmatmul.mubr.f32.gmra.mrb[0].mxu0 %v759
    %v1036 = vpop.f32.mrb[0].mxu0
    %v1037 = vadd.f32 0.0, %v1036
    %v1038 = vpop.f32.mrb[0].mxu0
    %1039 = vmatprep.mubr.f32.mxu0 0.0
    %1040 = vmatmul.mubr.f32.gmra.mrb[0].mxu0 %v762
    %v1041 = vpop.f32.mrb[0].mxu0
    %v1042 = vadd.f32 0.0, %v1041
    %v1043 = vpop.f32.mrb[0].mxu0
    %1044 = vmatprep.mubr.f32.mxu0 0.0
    %1045 = vmatmul.mubr.f32.gmra.mrb[0].mxu0 %v765
    %v1046 = vpop.f32.mrb[0].mxu0
    %v1047 = vadd.f32 0.0, %v1046
    %v1048 = vpop.f32.mrb[0].mxu0
    %1049 = vmatprep.mubr.f32.mxu0 0.0
    %1050 = vmatmul.mubr.f32.gmra.mrb[0].mxu0 %v768
    %v1051 = vpop.f32.mrb[0].mxu0
    %v1052 = vadd.f32 0.0, %v1051
    %v1053 = vpop.f32.mrb[0].mxu0
    %1054 = vmatprep.mubr.f32.mxu0 0.0
    %1055 = vmatmul.mubr.f32.gmra.mrb[0].mxu0 %v771
    %v1056 = vpop.f32.mrb[0].mxu0
    %v1057 = vadd.f32 0.0, %v1056
    %v1058 = vpop.f32.mrb[0].mxu0
    %1059 = vmatprep.mubr.f32.mxu0 0.0
    %1060 = vmatmul.mubr.f32.gmra.mrb[0].mxu0 %v774
    %v1061 = vpop.f32.mrb[0].mxu0
    %v1062 = vadd.f32 0.0, %v1061
    %v1063 = vpop.f32.mrb[0].mxu0
    %1064 = vmatprep.mubr.f32.mxu0 0.0
    %1065 = vmatmul.mubr.f32.gmra.mrb[0].mxu0 %v777
    %v1066 = vpop.f32.mrb[0].mxu0
    %v1067 = vadd.f32 0.0, %v1066
    %v1068 = vpop.f32.mrb[0].mxu0
    %1069 = vmatprep.mubr.f32.mxu0 0.0
    %1070 = vmatmul.mubr.f32.gmra.mrb[0].mxu0 %v780
    %v1071 = vpop.f32.mrb[0].mxu0
    %v1072 = vadd.f32 0.0, %v1071
    %v1073 = vpop.f32.mrb[0].mxu0
    %1074 = vmatprep.mubr.f32.mxu0 0.0
    %1075 = vmatmul.mubr.f32.gmra.mrb[0].mxu0 %v783
    %v1076 = vpop.f32.mrb[0].mxu0
    %v1077 = vadd.f32 0.0, %v1076
    %v1078 = vpop.f32.mrb[0].mxu0
    %1079 = vmatprep.mubr.f32.mxu0 0.0
    %1080 = vmatmul.mubr.f32.gmra.mrb[0].mxu0 %v786
    %v1081 = vpop.f32.mrb[0].mxu0
    %v1082 = vadd.f32 0.0, %v1081
    %v1083 = vpop.f32.mrb[0].mxu0
    %1084 = vmatprep.mubr.f32.mxu0 0.0
    %1085 = vmatmul.mubr.f32.gmra.mrb[0].mxu0 %v789
    %v1086 = vpop.f32.mrb[0].mxu0
    %v1087 = vadd.f32 0.0, %v1086
    %v1088 = vpop.f32.mrb[0].mxu0
    %1089 = vmatprep.mubr.f32.mxu0 0.0
    %1090 = vmatmul.mubr.f32.gmra.mrb[0].mxu0 %v792
    %v1091 = vpop.f32.mrb[0].mxu0
    %v1092 = vadd.f32 0.0, %v1091
    %v1093 = vpop.f32.mrb[0].mxu0
    %1094 = vmatprep.mubr.f32.mxu0 0.0
    %1095 = vmatmul.mubr.f32.gmra.mrb[0].mxu0 %v795
    %v1096 = vpop.f32.mrb[0].mxu0
    %v1097 = vadd.f32 0.0, %v1096
    %v1098 = vpop.f32.mrb[0].mxu0
    %1099 = vmatprep.mubr.f32.mxu0 0.0
    %1100 = vmatmul.mubr.f32.gmra.mrb[0].mxu0 %v798
    %v1101 = vpop.f32.mrb[0].mxu0
    %v1102 = vadd.f32 0.0, %v1101
    %v1103 = vpop.f32.mrb[0].mxu0
    %1104 = vmatprep.mubr.f32.mxu0 0.0
    %1105 = vmatmul.mubr.f32.gmra.mrb[0].mxu0 %v801
    %v1106 = vpop.f32.mrb[0].mxu0
    %v1107 = vadd.f32 0.0, %v1106
    %v1108 = vpop.f32.mrb[0].mxu0
    %1109 = vmatprep.mubr.f32.mxu0 0.0
    %1110 = vmatmul.mubr.f32.gmra.mrb[0].mxu0 %v804
    %v1111 = vpop.f32.mrb[0].mxu0
    %v1112 = vadd.f32 0.0, %v1111
    %v1113 = vpop.f32.mrb[0].mxu0
    %1114 = vmatprep.mubr.f32.mxu0 0.0
    %1115 = vmatmul.mubr.f32.gmra.mrb[0].mxu0 %v807
    %v1116 = vpop.f32.mrb[0].mxu0
    %v1117 = vadd.f32 0.0, %v1116
    %v1118 = vpop.f32.mrb[0].mxu0
    %1119 = vmatprep.mubr.f32.mxu0 0.0
    %1120 = vmatmul.mubr.f32.gmra.mrb[0].mxu0 %v810
    %v1121 = vpop.f32.mrb[0].mxu0
    %v1122 = vadd.f32 0.0, %v1121
    %v1123 = vpop.f32.mrb[0].mxu0
    %1124 = vmatprep.mubr.f32.mxu0 0.0
    %1125 = vmatmul.mubr.f32.gmra.mrb[0].mxu0 %v813
    %v1126 = vpop.f32.mrb[0].mxu0
    %v1127 = vadd.f32 0.0, %v1126
    %v1128 = vpop.f32.mrb[0].mxu0
    %1129 = vmatprep.mubr.f32.mxu0 0.0
    %1130 = vmatmul.mubr.f32.gmra.mrb[0].mxu0 %v816
    %v1131 = vpop.f32.mrb[0].mxu0
    %v1132 = vadd.f32 0.0, %v1131
    %v1133 = vpop.f32.mrb[0].mxu0
    %1134 = vmatprep.mubr.f32.mxu0 0.0
    %1135 = vmatmul.mubr.f32.gmra.mrb[0].mxu0 %v819
    %v1136 = vpop.f32.mrb[0].mxu0
    %v1137 = vadd.f32 0.0, %v1136
    %v1138 = vpop.f32.mrb[0].mxu0
    %1139 = vmatprep.mubr.f32.mxu0 0.0
    %1140 = vmatmul.mubr.f32.gmra.mrb[0].mxu0 %v822
    %v1141 = vpop.f32.mrb[0].mxu0
    %v1142 = vadd.f32 0.0, %v1141
    %v1143 = vpop.f32.mrb[0].mxu0
    %1144 = vmatprep.mubr.f32.mxu0 0.0
    %1145 = vmatmul.mubr.f32.gmra.mrb[0].mxu0 %v825
    %v1146 = vpop.f32.mrb[0].mxu0
    %v1147 = vadd.f32 0.0, %v1146
    %v1148 = vpop.f32.mrb[0].mxu0
    %1149 = vmatprep.mubr.f32.mxu0 0.0
    %1150 = vmatmul.mubr.f32.gmra.mrb[0].mxu0 %v828
    %v1151 = vpop.f32.mrb[0].mxu0
    %v1152 = vadd.f32 0.0, %v1151
    %v1153 = vpop.f32.mrb[0].mxu0
    %1154 = vmatprep.mubr.f32.mxu0 0.0
    %1155 = vmatmul.mubr.f32.gmra.mrb[0].mxu0 %v831
    %v1156 = vpop.f32.mrb[0].mxu0
    %v1157 = vadd.f32 0.0, %v1156
    %v1158 = vpop.f32.mrb[0].mxu0
    %1159 = vmatprep.mubr.f32.mxu0 0.0
    %1160 = vmatmul.mubr.f32.gmra.mrb[0].mxu0 %v834
    %v1161 = vpop.f32.mrb[0].mxu0
    %v1162 = vadd.f32 0.0, %v1161
    %v1163 = vpop.f32.mrb[0].mxu0
    %1164 = vmatprep.mubr.f32.mxu0 0.0
    %1165 = vmatmul.mubr.f32.gmra.mrb[0].mxu0 %v837
    %v1166 = vpop.f32.mrb[0].mxu0
    %v1167 = vadd.f32 0.0, %v1166
    %v1168 = vpop.f32.mrb[0].mxu0
    %1169 = vmatprep.mubr.f32.mxu0 0.0
    %1170 = vmatmul.mubr.f32.gmra.mrb[0].mxu0 %v840
    %v1171 = vpop.f32.mrb[0].mxu0
    %v1172 = vadd.f32 0.0, %v1171
    %v1173 = vpop.f32.mrb[0].mxu0
    %1174 = vmatprep.mubr.f32.mxu0 0.0
    %1175 = vmatmul.mubr.f32.gmra.mrb[0].mxu0 %v843
    %v1176 = vpop.f32.mrb[0].mxu0
    %v1177 = vadd.f32 0.0, %v1176
    %v1178 = vpop.f32.mrb[0].mxu0
    %1179 = vmatprep.mubr.f32.mxu0 0.0
    %1180 = vmatmul.mubr.f32.gmra.mrb[0].mxu0 %v846
    %v1181 = vpop.f32.mrb[0].mxu0
    %v1182 = vadd.f32 0.0, %v1181
    %v1183 = vpop.f32.mrb[0].mxu0
    %1184 = vmatprep.mubr.f32.mxu0 0.0
    %1185 = vmatmul.mubr.f32.gmra.mrb[0].mxu0 %v849
    %v1186 = vpop.f32.mrb[0].mxu0
    %v1187 = vadd.f32 0.0, %v1186
    %v1188 = vpop.f32.mrb[0].mxu0
    %1189 = vmatprep.mubr.f32.mxu0 0.0
    %1190 = vmatmul.mubr.f32.gmra.mrb[0].mxu0 %v852
    %v1191 = vpop.f32.mrb[0].mxu0
    %v1192 = vadd.f32 0.0, %v1191
    %v1193 = vpop.f32.mrb[0].mxu0
    %1194 = vmatprep.mubr.f32.mxu0 0.0
    %1195 = vmatmul.mubr.f32.gmra.mrb[0].mxu0 %v855
    %v1196 = vpop.f32.mrb[0].mxu0
    %v1197 = vadd.f32 0.0, %v1196
    %v1198 = vpop.f32.mrb[0].mxu0
    %1199 = vmatprep.mubr.f32.mxu0 0.0
    %1200 = vmatmul.mubr.f32.gmra.mrb[0].mxu0 %v858
    %v1201 = vpop.f32.mrb[0].mxu0
    %v1202 = vadd.f32 0.0, %v1201
    %v1203 = vpop.f32.mrb[0].mxu0
    %1204 = vmatprep.mubr.f32.mxu0 0.0
    %1205 = vmatmul.mubr.f32.gmra.mrb[0].mxu0 %v861
    %v1206 = vpop.f32.mrb[0].mxu0
    %v1207 = vadd.f32 0.0, %v1206
    %v1208 = vpop.f32.mrb[0].mxu0
    %1209 = vmatprep.mubr.f32.mxu0 0.0
    %1210 = vmatmul.mubr.f32.gmra.mrb[0].mxu0 %v864
    %v1211 = vpop.f32.mrb[0].mxu0
    %v1212 = vadd.f32 0.0, %v1211
    %v1213 = vpop.f32.mrb[0].mxu0
    %1214 = vmatprep.mubr.f32.mxu0 0.0
    %1215 = vmatmul.mubr.f32.gmra.mrb[0].mxu0 %v867
    %v1216 = vpop.f32.mrb[0].mxu0
    %v1217 = vadd.f32 0.0, %v1216
    %v1218 = vpop.f32.mrb[0].mxu0
    %1219 = vmatprep.mubr.f32.mxu0 0.0
    %1220 = vmatmul.mubr.f32.gmra.mrb[0].mxu0 %v870
    %v1221 = vpop.f32.mrb[0].mxu0
    %v1222 = vadd.f32 0.0, %v1221
    %v1223 = vpop.f32.mrb[0].mxu0
    %1224 = vmatprep.mubr.f32.mxu0 0.0
    %1225 = vmatmul.mubr.f32.gmra.mrb[0].mxu0 %v873
    %v1226 = vpop.f32.mrb[0].mxu0
    %v1227 = vadd.f32 0.0, %v1226
    %v1228 = vpop.f32.mrb[0].mxu0
    %1229 = vmatprep.mubr.f32.mxu0 0.0
    %1230 = vmatmul.mubr.f32.gmra.mrb[0].mxu0 %v876
    %v1231 = vpop.f32.mrb[0].mxu0
    %v1232 = vadd.f32 0.0, %v1231
    %v1233 = vpop.f32.mrb[0].mxu0
    %1234 = vmatprep.mubr.f32.mxu0 0.0
    %1235 = vmatmul.mubr.f32.gmra.mrb[0].mxu0 %v879
    %v1236 = vpop.f32.mrb[0].mxu0
    %v1237 = vadd.f32 0.0, %v1236
    %v1238 = vpop.f32.mrb[0].mxu0
    %1239 = vmatprep.mubr.f32.mxu0 0.0
    %1240 = vmatmul.mubr.f32.gmra.mrb[0].mxu0 %v882
    %v1241 = vpop.f32.mrb[0].mxu0
    %v1242 = vadd.f32 0.0, %v1241
    %v1243 = vpop.f32.mrb[0].mxu0
    %1244 = vmatprep.mubr.f32.mxu0 0.0
    %1245 = vmatmul.mubr.f32.gmra.mrb[0].mxu0 %v885
    %v1246 = vpop.f32.mrb[0].mxu0
    %v1247 = vadd.f32 0.0, %v1246
    %v1248 = vpop.f32.mrb[0].mxu0
    %1249 = vmatprep.mubr.f32.mxu0 0.0
    %1250 = vmatmul.mubr.f32.gmra.mrb[0].mxu0 %v888
    %v1251 = vpop.f32.mrb[0].mxu0
    %v1252 = vadd.f32 0.0, %v1251
    %v1253 = vpop.f32.mrb[0].mxu0
    %1254 = vmatprep.mubr.f32.mxu0 0.0
    %1255 = vmatmul.mubr.f32.gmra.mrb[0].mxu0 %v891
    %v1256 = vpop.f32.mrb[0].mxu0
    %v1257 = vadd.f32 0.0, %v1256
    %v1258 = vpop.f32.mrb[0].mxu0
    %1259 = vmatprep.mubr.f32.mxu0 0.0
    %1260 = vmatmul.mubr.f32.gmra.mrb[0].mxu0 %v894
    %v1261 = vpop.f32.mrb[0].mxu0
    %v1262 = vadd.f32 0.0, %v1261
    %v1263 = vpop.f32.mrb[0].mxu0
    %1264 = vmatprep.mubr.f32.mxu0 0.0
    %1265 = vmatmul.mubr.f32.gmra.mrb[0].mxu0 %v897
    %v1266 = vpop.f32.mrb[0].mxu0
    %v1267 = vadd.f32 0.0, %v1266
    %v1268 = vpop.f32.mrb[0].mxu0
    %1269 = vmatprep.mubr.f32.mxu0 0.0
    %1270 = vmatmul.mubr.f32.gmra.mrb[0].mxu0 %v900
    %v1271 = vpop.f32.mrb[0].mxu0
    %v1272 = vadd.f32 0.0, %v1271
    %v1273 = vpop.f32.mrb[0].mxu0
    %1274 = vmatprep.mubr.f32.mxu0 0.0
    %1275 = vmatmul.mubr.f32.gmra.mrb[0].mxu0 %v903
    %v1276 = vpop.f32.mrb[0].mxu0
    %v1277 = vadd.f32 0.0, %v1276
    %v1278 = vpop.f32.mrb[0].mxu0
    %1279 = vmatprep.mubr.f32.mxu0 0.0
    %1280 = vmatmul.mubr.f32.gmra.mrb[0].mxu0 %v906
    %v1281 = vpop.f32.mrb[0].mxu0
    %v1282 = vadd.f32 0.0, %v1281
    %v1283 = vpop.f32.mrb[0].mxu0
    %1284 = vmatprep.mubr.f32.mxu0 0.0
    %1285 = vmatmul.mubr.f32.gmra.mrb[0].mxu0 %v909
    %v1286 = vpop.f32.mrb[0].mxu0
    %v1287 = vadd.f32 0.0, %v1286
    %v1288 = vpop.f32.mrb[0].mxu0
    %1289 = vmatprep.mubr.f32.mxu0 0.0
    %1290 = vmatmul.mubr.f32.gmra.mrb[0].mxu0 %v912
    %v1291 = vpop.f32.mrb[0].mxu0
    %v1292 = vadd.f32 0.0, %v1291
    %v1293 = vpop.f32.mrb[0].mxu0
    %1294 = vmatprep.mubr.f32.mxu0 0.0
    %1295 = vmatmul.mubr.f32.gmra.mrb[0].mxu0 %v915
    %v1296 = vpop.f32.mrb[0].mxu0
    %v1297 = vadd.f32 0.0, %v1296
    %v1298 = vpop.f32.mrb[0].mxu0
    %1299 = vmatprep.mubr.f32.mxu0 0.0
    %1300 = vmatmul.mubr.f32.gmra.mrb[0].mxu0 %v918
    %v1301 = vpop.f32.mrb[0].mxu0
    %v1302 = vadd.f32 0.0, %v1301
    %v1303 = vpop.f32.mrb[0].mxu0
    %1304 = vdwg.mxu0
    %1305 = vst [vmem:[#allocation2] sm:$0xff] %v987
    %1306 = vst [vmem:[#allocation2 + $0x8] sm:$0xff] %v992
    %1307 = vst [vmem:[#allocation2 + $0x10] sm:$0xff] %v997
    %1308 = vst [vmem:[#allocation2 + $0x18] sm:$0xff] %v1002
    %1309 = vst [vmem:[#allocation2 + $0x20] sm:$0xff] %v1007
    %1310 = vst [vmem:[#allocation2 + $0x28] sm:$0xff] %v1012
    %1311 = vst [vmem:[#allocation2 + $0x30] sm:$0xff] %v1017
    %1312 = vst [vmem:[#allocation2 + $0x38] sm:$0xff] %v1022
    %1313 = vst [vmem:[#allocation2 + $0x40] sm:$0xff] %v1027
    %1314 = vst [vmem:[#allocation2 + $0x48] sm:$0xff] %v1032
    %1315 = vst [vmem:[#allocation2 + $0x50] sm:$0xff] %v1037
    %1316 = vst [vmem:[#allocation2 + $0x58] sm:$0xff] %v1042
    %1317 = vst [vmem:[#allocation2 + $0x60] sm:$0xff] %v1047
    %1318 = vst [vmem:[#allocation2 + $0x68] sm:$0xff] %v1052
    %1319 = vst [vmem:[#allocation2 + $0x70] sm:$0xff] %v1057
    %1320 = vst [vmem:[#allocation2 + $0x78] sm:$0xff] %v1062
    %1321 = vst [vmem:[#allocation2 + $0x80] sm:$0xff] %v1067
    %1322 = vst [vmem:[#allocation2 + $0x88] sm:$0xff] %v1072
    %1323 = vst [vmem:[#allocation2 + $0x90] sm:$0xff] %v1077
    %1324 = vst [vmem:[#allocation2 + $0x98] sm:$0xff] %v1082
    %1325 = vst [vmem:[#allocation2 + $0xa0] sm:$0xff] %v1087
    %1326 = vst [vmem:[#allocation2 + $0xa8] sm:$0xff] %v1092
    %1327 = vst [vmem:[#allocation2 + $0xb0] sm:$0xff] %v1097
    %1328 = vst [vmem:[#allocation2 + $0xb8] sm:$0xff] %v1102
    %1329 = vst [vmem:[#allocation2 + $0xc0] sm:$0xff] %v1107
    %1330 = vst [vmem:[#allocation2 + $0xc8] sm:$0xff] %v1112
    %1331 = vst [vmem:[#allocation2 + $0xd0] sm:$0xff] %v1117
    %1332 = vst [vmem:[#allocation2 + $0xd8] sm:$0xff] %v1122
    %1333 = vst [vmem:[#allocation2 + $0xe0] sm:$0xff] %v1127
    %1334 = vst [vmem:[#allocation2 + $0xe8] sm:$0xff] %v1132
    %1335 = vst [vmem:[#allocation2 + $0xf0] sm:$0xff] %v1137
    %1336 = vst [vmem:[#allocation2 + $0xf8] sm:$0xff] %v1142
    %1337 = vst [vmem:[#allocation2 + $0x100] sm:$0xff] %v1147
    %1338 = vst [vmem:[#allocation2 + $0x108] sm:$0xff] %v1152
    %1339 = vst [vmem:[#allocation2 + $0x110] sm:$0xff] %v1157
    %1340 = vst [vmem:[#allocation2 + $0x118] sm:$0xff] %v1162
    %1341 = vst [vmem:[#allocation2 + $0x120] sm:$0xff] %v1167
    %1342 = vst [vmem:[#allocation2 + $0x128] sm:$0xff] %v1172
    %1343 = vst [vmem:[#allocation2 + $0x130] sm:$0xff] %v1177
    %1344 = vst [vmem:[#allocation2 + $0x138] sm:$0xff] %v1182
    %1345 = vst [vmem:[#allocation2 + $0x140] sm:$0xff] %v1187
    %1346 = vst [vmem:[#allocation2 + $0x148] sm:$0xff] %v1192
    %1347 = vst [vmem:[#allocation2 + $0x150] sm:$0xff] %v1197
    %1348 = vst [vmem:[#allocation2 + $0x158] sm:$0xff] %v1202
    %1349 = vst [vmem:[#allocation2 + $0x160] sm:$0xff] %v1207
    %1350 = vst [vmem:[#allocation2 + $0x168] sm:$0xff] %v1212
    %1351 = vst [vmem:[#allocation2 + $0x170] sm:$0xff] %v1217
    %1352 = vst [vmem:[#allocation2 + $0x178] sm:$0xff] %v1222
    %1353 = vst [vmem:[#allocation2 + $0x180] sm:$0xff] %v1227
    %1354 = vst [vmem:[#allocation2 + $0x188] sm:$0xff] %v1232
    %1355 = vst [vmem:[#allocation2 + $0x190] sm:$0xff] %v1237
    %1356 = vst [vmem:[#allocation2 + $0x198] sm:$0xff] %v1242
    %1357 = vst [vmem:[#allocation2 + $0x1a0] sm:$0xff] %v1247
    %1358 = vst [vmem:[#allocation2 + $0x1a8] sm:$0xff] %v1252
    %1359 = vst [vmem:[#allocation2 + $0x1b0] sm:$0xff] %v1257
    %1360 = vst [vmem:[#allocation2 + $0x1b8] sm:$0xff] %v1262
    %1361 = vst [vmem:[#allocation2 + $0x1c0] sm:$0xff] %v1267
    %1362 = vst [vmem:[#allocation2 + $0x1c8] sm:$0xff] %v1272
    %1363 = vst [vmem:[#allocation2 + $0x1d0] sm:$0xff] %v1277
    %1364 = vst [vmem:[#allocation2 + $0x1d8] sm:$0xff] %v1282
    %1365 = vst [vmem:[#allocation2 + $0x1e0] sm:$0xff] %v1287
    %1366 = vst [vmem:[#allocation2 + $0x1e8] sm:$0xff] %v1292
    %1367 = vst [vmem:[#allocation2 + $0x1f0] sm:$0xff] %v1297
    %1368 = vst [vmem:[#allocation2 + $0x1f8] sm:$0xff] %v1302
    // Predicated region
    $region14: #{tpu_custom_call.1} parent=1 // pred_check
      _
    $region15: #{tpu_custom_call.1} parent=1 // pred_check_branch
      %1370 = sbr.rel (0) target = $region17
    $region16: #{tpu_custom_call.1} parent=1 // pred_region
      %s1372 = ssub.s32 8192, 8192
      %1373 = vsyncadd [#allocation3], %s1372
      %s1374 = sshll.u32 [#allocation2], 4
      %s1375 = int_to_ptr.vmem [resolvable:$true] %s1374
      %1380 = dma.vmem_to_hbm [thread:$0]  %s1375, 8192, %s3, [#allocation3], 128, 128, 8
    $region17: #{tpu_custom_call.1} parent=1 // pred_fallthru
      _
    // Predicated region
    $region18: #{tpu_custom_call.1} parent=1 // pred_check
      _
    $region19: #{tpu_custom_call.1} parent=1 // pred_check_branch
      %1382 = sbr.rel (0) target = $region21
    $region20: #{tpu_custom_call.1} parent=1 // pred_region
      %1383 = dma.done [#allocation3], 8192
    $region21: #{tpu_custom_call.1} parent=1 // pred_fallthru
      _
    %1384 = vsyncpa [#allocation3], 1

</llo_original>
